<compile_context>
chip_gen: v7x
topology: tpu7x:2x2x1
jax: 0.10.0
libtpu: 0.0.40
codegen_flags: <defaults>
</compile_context>

<pallas_src>
import jax
import jax.numpy as jnp
from jax.experimental import pallas as pl
from jax.experimental.pallas import tpu as pltpu


def _lstm_cell_kernel(x_ref, h_ref, c_ref, wih_ref, whh_ref, b_ref,
                      hout_ref, cout_ref):
    H = hout_ref.shape[-1]

    x = x_ref[...]
    h = h_ref[...]

    # Two fused MXU matmuls -> lane-dense (tb, 4H) gate block + one bias add.
    gates = (jnp.dot(x, wih_ref[...], preferred_element_type=jnp.float32)
             + jnp.dot(h, whh_ref[...], preferred_element_type=jnp.float32)
             + b_ref[...])

    # Weight columns are pre-permuted to (i, f, o, g): one sigmoid over the
    # contiguous leading 3H lanes, one tanh over the trailing H lanes.
    sig = jax.nn.sigmoid(gates[:, :3 * H])
    g_g = jnp.tanh(gates[:, 3 * H:])

    i_g = sig[:, 0 * H:1 * H]
    f_g = sig[:, 1 * H:2 * H]
    o_g = sig[:, 2 * H:3 * H]

    c_new = f_g * c_ref[...] + i_g * g_g
    h_new = o_g * jnp.tanh(c_new)

    cout_ref[...] = c_new.astype(cout_ref.dtype)
    hout_ref[...] = h_new.astype(hout_ref.dtype)


def _vmem_limit_bytes(tb, H, itemsize=4):
    # activations (double-buffered) + resident fused weights/bias + headroom
    act = 5 * tb * H + tb * 4 * H          # x, h, c, h_out, c_out, gates
    wts = 2 * H * 4 * H + 4 * H            # W_ih^T, W_hh^T, bias
    need = (2 * act + wts) * itemsize
    return int(min(64 * 2 ** 20, max(16 * 2 ** 20, 4 * need)))


def lstm_cell_pallas(x, h, c, w_ih_t, w_hh_t, bias):
    """x, h, c: (B, H) f32.  w_ih_t / w_hh_t: (H, 4H).  bias: (1, 4H).

    Weight/bias columns must already be in (i, f, o, g) gate order.
    """
    B, H = x.shape

    # One tile for small B (block == full array -> always tiling-legal);
    # otherwise 256-row tiles with zero-padding of the batch dim.
    if B <= 256:
        tb, Bp = B, B
    else:
        tb = 256
        Bp = ((B + tb - 1) // tb) * tb
    if Bp != B:
        pad = ((0, Bp - B), (0, 0))
        x = jnp.pad(x, pad)
        h = jnp.pad(h, pad)
        c = jnp.pad(c, pad)

    grid = (Bp // tb,)

    act_spec = pl.BlockSpec((tb, H), lambda i: (i, 0))
    w_spec = pl.BlockSpec((H, 4 * H), lambda i: (0, 0))    # VMEM-resident
    b_spec = pl.BlockSpec((1, 4 * H), lambda i: (0, 0))

    h_new, c_new = pl.pallas_call(
        _lstm_cell_kernel,
        out_shape=(jax.ShapeDtypeStruct((Bp, H), jnp.float32),
                   jax.ShapeDtypeStruct((Bp, H), jnp.float32)),
        grid=grid,
        in_specs=[act_spec, act_spec, act_spec, w_spec, w_spec, b_spec],
        out_specs=(act_spec, act_spec),
        compiler_params=pltpu.CompilerParams(
            dimension_semantics=("parallel",),
            vmem_limit_bytes=_vmem_limit_bytes(tb, H)),
    )(x, h, c, w_ih_t, w_hh_t, bias)

    if Bp != B:
        h_new = h_new[:B]
        c_new = c_new[:B]
    return h_new, c_new


class LSTMNetBlockPallas:
    """JAX/Pallas port of LSTMNetBlock (one LSTMCell, custom bias init)."""

    def __init__(self, hidden_sz, key):
        H = hidden_sz
        self.H = H
        k_ih, k_hh = jax.random.split(key, 2)

        # xavier_normal_ on (4H, H) weights: std = sqrt(2 / (fan_in + fan_out))
        std = (2.0 / (4 * H + H)) ** 0.5
        w_ih = jax.random.normal(k_ih, (4 * H, H), jnp.float32) * std
        w_hh = jax.random.normal(k_hh, (4 * H, H), jnp.float32) * std

        # bias pattern from init_weigths(): [-4]*H, [-4]*H, [0]*H, [0]*H
        # applied to BOTH bias_ih and bias_hh, so the summed bias is doubled.
        b_single = jnp.concatenate([
            jnp.full((H,), -4.0, jnp.float32),
            jnp.full((H,), -4.0, jnp.float32),
            jnp.zeros((H,), jnp.float32),
            jnp.zeros((H,), jnp.float32),
        ])
        bias_sum = b_single + b_single                       # (4H,)

        # Keep torch-layout params for the reference check.
        self.w_ih_raw = w_ih                                 # (4H, H)
        self.w_hh_raw = w_hh                                 # (4H, H)
        self.bias_raw = bias_sum                             # (4H,)

        # Kernel layout: permute gate rows from torch order (i, f, g, o) to
        # (i, f, o, g) and pre-transpose so gates = x @ W^T is a single fused
        # (H, 4H) matmul per operand with contiguous sigmoid lanes.
        perm = jnp.concatenate([
            jnp.arange(0, 2 * H),            # i, f
            jnp.arange(3 * H, 4 * H),        # o
            jnp.arange(2 * H, 3 * H),        # g
        ])
        self.w_ih_t = jnp.transpose(w_ih[perm])              # (H, 4H)
        self.w_hh_t = jnp.transpose(w_hh[perm])              # (H, 4H)
        self.bias = bias_sum[perm].reshape(1, 4 * H)         # (1, 4H)

    def __call__(self, x, hc1):
        h0, c0 = hc1
        h_new, c_new = lstm_cell_pallas(
            x, h0, c0, self.w_ih_t, self.w_hh_t, self.bias)
        # module returns (c_0, (h_0, c_0))
        return c_new, (h_new, c_new)


def _reference_torch_layout(x, h, c, w_ih, w_hh, bias_sum):
    """Pure-JAX LSTMCell reference in the original torch (i,f,g,o) layout."""
    H = x.shape[-1]
    gates = x @ w_ih.T + h @ w_hh.T + bias_sum
    i = jax.nn.sigmoid(gates[:, 0 * H:1 * H])
    f = jax.nn.sigmoid(gates[:, 1 * H:2 * H])
    g = jnp.tanh(gates[:, 2 * H:3 * H])
    o = jax.nn.sigmoid(gates[:, 3 * H:4 * H])
    c_new = f * c + i * g
    h_new = o * jnp.tanh(c_new)
    return h_new, c_new


if __name__ == "__main__":
    hidden = 32
    batch = 8

    key = jax.random.PRNGKey(0)
    k_mod, k_x, k_h, k_c = jax.random.split(key, 4)

    block = LSTMNetBlockPallas(hidden, k_mod)

    x = jax.random.normal(k_x, (batch, hidden), jnp.float32)
    h0 = jax.random.normal(k_h, (batch, hidden), jnp.float32)
    c0 = jax.random.normal(k_c, (batch, hidden), jnp.float32)

    out_c, (out_h, out_c2) = block(x, (h0, c0))
    jax.block_until_ready((out_c, out_h, out_c2))

    # correctness check vs pure-JAX reference in the original torch layout
    ref_h, ref_c = _reference_torch_layout(
        x, h0, c0, block.w_ih_raw, block.w_hh_raw, block.bias_raw)
    assert jnp.allclose(out_h, ref_h, atol=1e-5, rtol=1e-5)
    assert jnp.allclose(out_c, ref_c, atol=1e-5, rtol=1e-5)
    assert jnp.allclose(out_c, out_c2)

    print("KERNEL_OK")
</pallas_src>

<mosaic_0001>
module attributes {stable_mosaic.version = 11 : i64} {
  func.func @_lstm_cell_kernel(%arg0: i32, %arg1: memref<8x32xf32, #tpu.memory_space<vmem>>, %arg2: memref<8x32xf32, #tpu.memory_space<vmem>>, %arg3: memref<8x32xf32, #tpu.memory_space<vmem>>, %arg4: memref<32x128xf32, #tpu.memory_space<vmem>>, %arg5: memref<32x128xf32, #tpu.memory_space<vmem>>, %arg6: memref<1x128xf32, #tpu.memory_space<vmem>>, %arg7: memref<8x32xf32, #tpu.memory_space<vmem>>, %arg8: memref<8x32xf32, #tpu.memory_space<vmem>>) attributes {dimension_semantics = [#tpu.dimension_semantics<parallel>], iteration_bounds = array<i64: 1>, scalar_prefetch = 0 : i64, scratch_operands = 0 : i64, tpu.core_type = #tpu.core_type<tc>, window_params = [{transform_indices = @transform_0, window_bounds = array<i64: 8, 32>}, {transform_indices = @transform_1, window_bounds = array<i64: 8, 32>}, {transform_indices = @transform_2, window_bounds = array<i64: 8, 32>}, {pipeline_mode = #tpu.pipeline_mode<synchronous>, transform_indices = @transform_3, window_bounds = array<i64: 32, 128>}, {pipeline_mode = #tpu.pipeline_mode<synchronous>, transform_indices = @transform_4, window_bounds = array<i64: 32, 128>}, {pipeline_mode = #tpu.pipeline_mode<synchronous>, transform_indices = @transform_5, window_bounds = array<i64: 1, 128>}, {transform_indices = @transform_6, window_bounds = array<i64: 8, 32>}, {transform_indices = @transform_7, window_bounds = array<i64: 8, 32>}]} {
    %c0 = arith.constant 0 : index
    %c0_0 = arith.constant 0 : index
    %0 = vector.load %arg1[%c0, %c0_0] : memref<8x32xf32, #tpu.memory_space<vmem>>, vector<8x32xf32>
    %c0_1 = arith.constant 0 : index
    %c0_2 = arith.constant 0 : index
    %1 = vector.load %arg2[%c0_1, %c0_2] : memref<8x32xf32, #tpu.memory_space<vmem>>, vector<8x32xf32>
    %c0_3 = arith.constant 0 : index
    %c0_4 = arith.constant 0 : index
    %2 = vector.load %arg4[%c0_3, %c0_4] : memref<32x128xf32, #tpu.memory_space<vmem>>, vector<32x128xf32>
    %cst = arith.constant dense<0.000000e+00> : vector<8x128xf32>
    %3 = tpu.matmul %0, %2, %cst {dimension_numbers = #tpu.dot_dimension_numbers<[1], [0], [0], [1], [0, 0, 1, 1], [], []>} : vector<8x32xf32>, vector<32x128xf32>, vector<8x128xf32> -> vector<8x128xf32>
    %c0_5 = arith.constant 0 : index
    %c0_6 = arith.constant 0 : index
    %4 = vector.load %arg5[%c0_5, %c0_6] : memref<32x128xf32, #tpu.memory_space<vmem>>, vector<32x128xf32>
    %cst_7 = arith.constant dense<0.000000e+00> : vector<8x128xf32>
    %5 = tpu.matmul %1, %4, %cst_7 {dimension_numbers = #tpu.dot_dimension_numbers<[1], [0], [0], [1], [0, 0, 1, 1], [], []>} : vector<8x32xf32>, vector<32x128xf32>, vector<8x128xf32> -> vector<8x128xf32>
    %6 = arith.addf %3, %5 : vector<8x128xf32>
    %c0_8 = arith.constant 0 : index
    %c0_9 = arith.constant 0 : index
    %7 = vector.load %arg6[%c0_8, %c0_9] : memref<1x128xf32, #tpu.memory_space<vmem>>, vector<1x128xf32>
    %8 = vector.broadcast %7 : vector<1x128xf32> to vector<8x128xf32>
    %9 = arith.addf %6, %8 : vector<8x128xf32>
    %10 = vector.extract_strided_slice %9 {offsets = [0, 0], sizes = [8, 96], strides = [1, 1]} : vector<8x128xf32> to vector<8x96xf32>
    %11 = arith.negf %10 : vector<8x96xf32>
    %12 = math.exp %11 : vector<8x96xf32>
    %cst_10 = arith.constant 1.000000e+00 : f32
    %13 = vector.broadcast %cst_10 : f32 to vector<8x96xf32>
    %14 = arith.addf %13, %12 : vector<8x96xf32>
    %15 = arith.divf %13, %14 : vector<8x96xf32>
    %16 = vector.extract_strided_slice %9 {offsets = [0, 96], sizes = [8, 32], strides = [1, 1]} : vector<8x128xf32> to vector<8x32xf32>
    %17 = math.tanh %16 : vector<8x32xf32>
    %18 = vector.extract_strided_slice %15 {offsets = [0, 0], sizes = [8, 32], strides = [1, 1]} : vector<8x96xf32> to vector<8x32xf32>
    %19 = vector.extract_strided_slice %15 {offsets = [0, 32], sizes = [8, 32], strides = [1, 1]} : vector<8x96xf32> to vector<8x32xf32>
    %20 = vector.extract_strided_slice %15 {offsets = [0, 64], sizes = [8, 32], strides = [1, 1]} : vector<8x96xf32> to vector<8x32xf32>
    %c0_11 = arith.constant 0 : index
    %c0_12 = arith.constant 0 : index
    %21 = vector.load %arg3[%c0_11, %c0_12] : memref<8x32xf32, #tpu.memory_space<vmem>>, vector<8x32xf32>
    %22 = arith.mulf %19, %21 : vector<8x32xf32>
    %23 = arith.mulf %18, %17 : vector<8x32xf32>
    %24 = arith.addf %22, %23 : vector<8x32xf32>
    %25 = math.tanh %24 : vector<8x32xf32>
    %26 = arith.mulf %20, %25 : vector<8x32xf32>
    %c0_13 = arith.constant 0 : index
    %c0_14 = arith.constant 0 : index
    %27 = vector.load %arg8[%c0_13, %c0_14] : memref<8x32xf32, #tpu.memory_space<vmem>>, vector<8x32xf32>
    tpu.vector_store %arg8[%c0_13, %c0_14], %24 {strides = array<i32>} : memref<8x32xf32, #tpu.memory_space<vmem>>, vector<8x32xf32>,
    %c0_15 = arith.constant 0 : index
    %c0_16 = arith.constant 0 : index
    %28 = vector.load %arg7[%c0_15, %c0_16] : memref<8x32xf32, #tpu.memory_space<vmem>>, vector<8x32xf32>
    tpu.vector_store %arg7[%c0_15, %c0_16], %26 {strides = array<i32>} : memref<8x32xf32, #tpu.memory_space<vmem>>, vector<8x32xf32>,
    return
  }
  func.func @transform_0(%arg0: i32) -> (i32, i32) {
    %c0_i32 = arith.constant 0 : i32
    %c0_i32_0 = arith.constant 0 : i32
    return %arg0, %c0_i32 : i32, i32
  }
  func.func @transform_1(%arg0: i32) -> (i32, i32) {
    %c0_i32 = arith.constant 0 : i32
    %c0_i32_0 = arith.constant 0 : i32
    return %arg0, %c0_i32 : i32, i32
  }
  func.func @transform_2(%arg0: i32) -> (i32, i32) {
    %c0_i32 = arith.constant 0 : i32
    %c0_i32_0 = arith.constant 0 : i32
    return %arg0, %c0_i32 : i32, i32
  }
  func.func @transform_3(%arg0: i32) -> (i32, i32) {
    %c0_i32 = arith.constant 0 : i32
    %c0_i32_0 = arith.constant 0 : i32
    %c0_i32_1 = arith.constant 0 : i32
    return %c0_i32, %c0_i32_0 : i32, i32
  }
  func.func @transform_4(%arg0: i32) -> (i32, i32) {
    %c0_i32 = arith.constant 0 : i32
    %c0_i32_0 = arith.constant 0 : i32
    %c0_i32_1 = arith.constant 0 : i32
    return %c0_i32, %c0_i32_0 : i32, i32
  }
  func.func @transform_5(%arg0: i32) -> (i32, i32) {
    %c0_i32 = arith.constant 0 : i32
    %c0_i32_0 = arith.constant 0 : i32
    %c0_i32_1 = arith.constant 0 : i32
    return %c0_i32, %c0_i32_0 : i32, i32
  }
  func.func @transform_6(%arg0: i32) -> (i32, i32) {
    %c0_i32 = arith.constant 0 : i32
    %c0_i32_0 = arith.constant 0 : i32
    return %arg0, %c0_i32 : i32, i32
  }
  func.func @transform_7(%arg0: i32) -> (i32, i32) {
    %c0_i32 = arith.constant 0 : i32
    %c0_i32_0 = arith.constant 0 : i32
    return %arg0, %c0_i32 : i32, i32
  }
}

</mosaic_0001>

<llo_original>
// kernel: tpu_custom_call.1
$region0: #{tpu_custom_call.1}
  #allocation0 [shape = 'u32[]', space=smem, size = 0x4, offset = 0x4, fixed_abs, tag = 'smem constant byte address 0x4 - core index']
  #allocation1 [shape = 'u32[144,128]{1,0:T(1,128)}', space=vmem, size = 0x12000, scoped, tag = 'internal scratch']
  %s0 = inlined_call_operand.hbm [shape: f32[8,32], index: 0, kind: input, shape index: {}]
  %s1 = inlined_call_operand.hbm [shape: f32[8,32], index: 1, kind: input, shape index: {}]
  %s2 = inlined_call_operand.hbm [shape: f32[8,32], index: 2, kind: input, shape index: {}]
  %s3 = inlined_call_operand.hbm [shape: f32[32,128], index: 3, kind: input, shape index: {}]
  %s4 = inlined_call_operand.hbm [shape: f32[32,128], index: 4, kind: input, shape index: {}]
  %s5 = inlined_call_operand.vmem [shape: f32[1,128], index: 5, kind: input, shape index: {}]
  %s6 = inlined_call_operand.hbm [shape: f32[8,32], index: 6, kind: output, shape index: {0}]
  %s7 = inlined_call_operand.hbm [shape: f32[8,32], index: 7, kind: output, shape index: {1}]
  %8 = xla_tuple %s6, %s7
  %s9 = sld [smem:[#allocation0]]
  $region62: #{tpu_custom_call.1} parent=0
    _
  %s11 = ssub.s32 1, %s9
  %s12 = scalar_select 0, %s11, %s9
  $region1: #{tpu_custom_call.1} parent=0
    #allocation2 [shape = 'u8[4096]{0}', space=vmem, size = 0x1000, scoped, tag = 'input window, operand 0, single buffered']
    #allocation3 [shape = 's32[1]{0}', space=sflag, size = 0x4, scoped, tag = 'scoped memory for tpu_custom_call.1']
    #allocation4 [shape = 's32[1]{0}', space=sflag, size = 0x4, scoped, tag = 'scoped memory for tpu_custom_call.1']
    #allocation5 [shape = 'u8[4096]{0}', space=vmem, size = 0x1000, scoped, tag = 'input window, operand 1, single buffered']
    #allocation6 [shape = 's32[1]{0}', space=sflag, size = 0x4, scoped, tag = 'scoped memory for tpu_custom_call.1']
    #allocation7 [shape = 'u8[4096]{0}', space=vmem, size = 0x1000, scoped, tag = 'input window, operand 2, single buffered']
    #allocation8 [shape = 'u8[16384]{0}', space=vmem, size = 0x4000, scoped, tag = 'input window, operand 3, single buffered']
    #allocation9 [shape = 's32[1]{0}', space=sflag, size = 0x4, scoped, tag = 'scoped memory for tpu_custom_call.1']
    #allocation10 [shape = 'u8[16384]{0}', space=vmem, size = 0x4000, scoped, tag = 'input window, operand 4, single buffered']
    #allocation11 [shape = 'u8[4096]{0}', space=vmem, size = 0x1000, scoped, tag = 'output window, operand 0, single buffered']
    #allocation12 [shape = 'u8[4096]{0}', space=vmem, size = 0x1000, scoped, tag = 'output window, operand 1, single buffered']
    #allocation13 [shape = 's32[1]{0}', space=sflag, size = 0x4, scoped, tag = 'scoped memory for tpu_custom_call.1']
    %13 = vsyncpa [#allocation3], 0
    %14 = vsyncpa [#allocation6], 0
    %15 = vsyncpa [#allocation9], 0
    %16 = vsyncpa [#allocation4], 0
    %17 = vsyncpa [#allocation13], 0
    // Predicated region
    $region2: #{tpu_custom_call.1} parent=1 // pred_check
      _
    $region3: #{tpu_custom_call.1} parent=1 // pred_check_branch
      %19 = sbr.rel (0) target = $region5
    $region4: #{tpu_custom_call.1} parent=1 // pred_region
      %s21 = ssub.s32 128, 128
      %22 = vsyncadd [#allocation3], %s21
      %s24 = sshll.u32 [#allocation2], 4
      %s25 = int_to_ptr.vmem [resolvable:$true] %s24
      %27 = dma.hbm_to_vmem [thread:$0]  %s0, 128, %s25, [#allocation3]
    $region5: #{tpu_custom_call.1} parent=1 // pred_fallthru
      _
    // Predicated region
    $region6: #{tpu_custom_call.1} parent=1 // pred_check
      _
    $region7: #{tpu_custom_call.1} parent=1 // pred_check_branch
      %29 = sbr.rel (0) target = $region9
    $region8: #{tpu_custom_call.1} parent=1 // pred_region
      %s31 = ssub.s32 128, 128
      %32 = vsyncadd [#allocation6], %s31
      %s34 = sshll.u32 [#allocation5], 4
      %s35 = int_to_ptr.vmem [resolvable:$true] %s34
      %37 = dma.hbm_to_vmem [thread:$0]  %s1, 128, %s35, [#allocation6]
    $region9: #{tpu_custom_call.1} parent=1 // pred_fallthru
      _
    // Predicated region
    $region10: #{tpu_custom_call.1} parent=1 // pred_check
      _
    $region11: #{tpu_custom_call.1} parent=1 // pred_check_branch
      %39 = sbr.rel (0) target = $region13
    $region12: #{tpu_custom_call.1} parent=1 // pred_region
      %s41 = ssub.s32 128, 128
      %42 = vsyncadd [#allocation6], %s41
      %s44 = sshll.u32 [#allocation7], 4
      %s45 = int_to_ptr.vmem [resolvable:$true] %s44
      %47 = dma.hbm_to_vmem [thread:$0]  %s2, 128, %s45, [#allocation6]
    $region13: #{tpu_custom_call.1} parent=1 // pred_fallthru
      _
    // Predicated region
    $region14: #{tpu_custom_call.1} parent=1 // pred_check
      _
    $region15: #{tpu_custom_call.1} parent=1 // pred_check_branch
      %49 = sbr.rel (0) target = $region17
    $region16: #{tpu_custom_call.1} parent=1 // pred_region
      %s51 = ssub.s32 512, 512
      %52 = vsyncadd [#allocation9], %s51
      %s53 = sshll.u32 [#allocation8], 4
      %s54 = int_to_ptr.vmem [resolvable:$true] %s53
      %59 = dma.hbm_to_vmem [thread:$0]  %s3, 512, %s54, [#allocation9], 128, 128, 8
    $region17: #{tpu_custom_call.1} parent=1 // pred_fallthru
      _
    // Predicated region
    $region18: #{tpu_custom_call.1} parent=1 // pred_check
      _
    $region19: #{tpu_custom_call.1} parent=1 // pred_check_branch
      %61 = sbr.rel (0) target = $region21
    $region20: #{tpu_custom_call.1} parent=1 // pred_region
      %s63 = ssub.s32 512, 512
      %64 = vsyncadd [#allocation9], %s63
      %s65 = sshll.u32 [#allocation10], 4
      %s66 = int_to_ptr.vmem [resolvable:$true] %s65
      %71 = dma.hbm_to_vmem [thread:$0]  %s4, 512, %s66, [#allocation9], 128, 128, 8
    $region21: #{tpu_custom_call.1} parent=1 // pred_fallthru
      _
    // Predicated region
    $region22: #{tpu_custom_call.1} parent=1 // pred_check
      _
    $region23: #{tpu_custom_call.1} parent=1 // pred_check_branch
      %73 = sbr.rel (0) target = $region25
    $region24: #{tpu_custom_call.1} parent=1 // pred_region
      _
    $region25: #{tpu_custom_call.1} parent=1 // pred_fallthru
      _
    // Predicated region
    $region26: #{tpu_custom_call.1} parent=1 // pred_check
      _
    $region27: #{tpu_custom_call.1} parent=1 // pred_check_branch
      %75 = sbr.rel (0) target = $region29
    $region28: #{tpu_custom_call.1} parent=1 // pred_region
      %76 = dma.done [#allocation3], 128
    $region29: #{tpu_custom_call.1} parent=1 // pred_fallthru
      _
    // Predicated region
    $region30: #{tpu_custom_call.1} parent=1 // pred_check
      _
    $region31: #{tpu_custom_call.1} parent=1 // pred_check_branch
      %78 = sbr.rel (0) target = $region33
    $region32: #{tpu_custom_call.1} parent=1 // pred_region
      %79 = dma.done [#allocation6], 128
    $region33: #{tpu_custom_call.1} parent=1 // pred_fallthru
      _
    // Predicated region
    $region34: #{tpu_custom_call.1} parent=1 // pred_check
      _
    $region35: #{tpu_custom_call.1} parent=1 // pred_check_branch
      %81 = sbr.rel (0) target = $region37
    $region36: #{tpu_custom_call.1} parent=1 // pred_region
      %82 = dma.done [#allocation6], 128
    $region37: #{tpu_custom_call.1} parent=1 // pred_fallthru
      _
    // Predicated region
    $region38: #{tpu_custom_call.1} parent=1 // pred_check
      _
    $region39: #{tpu_custom_call.1} parent=1 // pred_check_branch
      %84 = sbr.rel (0) target = $region41
    $region40: #{tpu_custom_call.1} parent=1 // pred_region
      %85 = dma.done [#allocation9], 512
    $region41: #{tpu_custom_call.1} parent=1 // pred_fallthru
      _
    // Predicated region
    $region42: #{tpu_custom_call.1} parent=1 // pred_check
      _
    $region43: #{tpu_custom_call.1} parent=1 // pred_check_branch
      %87 = sbr.rel (0) target = $region45
    $region44: #{tpu_custom_call.1} parent=1 // pred_region
      %88 = dma.done [#allocation9], 512
    $region45: #{tpu_custom_call.1} parent=1 // pred_fallthru
      _
    %v89 = vld [vmem:[#allocation2] sm:$0xff]
    %v90 = vld [vmem:[#allocation5] sm:$0xff]
    %v91 = vld [vmem:[#allocation8] sm:$0xff]
    %v92 = vld [vmem:[#allocation8 + $0x8] sm:$0xff]
    %v93 = vld [vmem:[#allocation8 + $0x10] sm:$0xff]
    %v94 = vld [vmem:[#allocation8 + $0x18] sm:$0xff]
    %v95 = vld [vmem:[#allocation10] sm:$0xff]
    %v96 = vld [vmem:[#allocation10 + $0x8] sm:$0xff]
    %v97 = vld [vmem:[#allocation10 + $0x10] sm:$0xff]
    %v98 = vld [vmem:[#allocation10 + $0x18] sm:$0xff]
    %vm99 = vcmask 261120
    %v101 = vsel %vm99, %v90, 0
    %103 = vmatprep.subr.mxu0 0.0
    %104 = vmatpush1.msra.mxu0 %v95
    %105 = vmatprep.subr.mxu0 0.0
    %106 = vmatpush1.msra.mxu0 %v96
    %107 = vmatprep.subr.mxu0 0.0
    %108 = vmatpush1.msra.mxu0 %v97
    %109 = vmatprep.subr.mxu0 0.0
    %110 = vmatpush1.msra.mxu0 %v98
    %111 = vmatprep.subr.mxu0 0.0
    %112 = vmatpush1.msra.mxu0 0.0
    %113 = vmatprep.subr.mxu0 0.0
    %114 = vmatpush1.msra.mxu0 0.0
    %115 = vmatprep.subr.mxu0 0.0
    %116 = vmatpush1.msra.mxu0 0.0
    %117 = vmatprep.subr.mxu0 0.0
    %118 = vmatpush1.msra.mxu0 0.0
    %119 = vmatprep.subr.mxu0 0.0
    %120 = vmatpush1.msra.mxu0 0.0
    %121 = vmatprep.subr.mxu0 0.0
    %122 = vmatpush1.msra.mxu0 0.0
    %123 = vmatprep.subr.mxu0 0.0
    %124 = vmatpush1.msra.mxu0 0.0
    %125 = vmatprep.subr.mxu0 0.0
    %126 = vmatpush1.msra.mxu0 0.0
    %127 = vmatprep.subr.mxu0 0.0
    %128 = vmatpush1.msra.mxu0 0.0
    %129 = vmatprep.subr.mxu0 0.0
    %130 = vmatpush1.msra.mxu0 0.0
    %131 = vmatprep.subr.mxu0 0.0
    %132 = vmatpush1.msra.mxu0 0.0
    %133 = vmatprep.subr.mxu0 0.0
    %134 = vmatpush1.msra.mxu0 0.0
    %135 = vmatprep.subr.mxu0 0.0
    %136 = vmatpush1.msra.mxu0 0.0
    %137 = vmatprep.subr.mxu0 0.0
    %138 = vmatpush1.msra.mxu0 0.0
    %139 = vmatprep.subr.mxu0 0.0
    %140 = vmatpush1.msra.mxu0 0.0
    %141 = vmatprep.subr.mxu0 0.0
    %142 = vmatpush1.msra.mxu0 0.0
    %143 = vmatprep.subr.mxu0 0.0
    %144 = vmatpush1.msra.mxu0 0.0
    %145 = vmatprep.subr.mxu0 0.0
    %146 = vmatpush1.msra.mxu0 0.0
    %147 = vmatprep.subr.mxu0 0.0
    %148 = vmatpush1.msra.mxu0 0.0
    %149 = vmatprep.subr.mxu0 0.0
    %150 = vmatpush1.msra.mxu0 0.0
    %151 = vmatprep.subr.mxu0 0.0
    %152 = vmatpush1.msra.mxu0 0.0
    %153 = vmatprep.subr.mxu0 0.0
    %154 = vmatpush1.msra.mxu0 0.0
    %155 = vmatprep.subr.mxu0 0.0
    %156 = vmatpush1.msra.mxu0 0.0
    %157 = vmatprep.subr.mxu0 0.0
    %158 = vmatpush1.msra.mxu0 0.0
    %159 = vmatprep.subr.mxu0 0.0
    %160 = vmatpush1.msra.mxu0 0.0
    %161 = vmatprep.subr.mxu0 0.0
    %162 = vmatpush1.msra.mxu0 0.0
    %163 = vmatprep.subr.mxu0 0.0
    %164 = vmatpush1.msra.mxu0 0.0
    %165 = vmatprep.subr.mxu0 0.0
    %166 = vmatpush1.msra.mxu0 0.0
    %167 = vmatprep.mubr.f32.mxu0 0.0
    %168 = vmatmul.mubr.f32.gmra.mrb[0].mxu0 %v101
    %v169 = vpop.f32.mrb[0].mxu0
    %v170 = vadd.f32 0.0, %v169
    %v171 = vpop.f32.mrb[0].mxu0
    %172 = vdwg.mxu0
    %v174 = vsel %vm99, %v89, 0
    %176 = vmatprep.subr.mxu0 0.0
    %177 = vmatpush1.msra.mxu0 %v91
    %178 = vmatprep.subr.mxu0 0.0
    %179 = vmatpush1.msra.mxu0 %v92
    %180 = vmatprep.subr.mxu0 0.0
    %181 = vmatpush1.msra.mxu0 %v93
    %182 = vmatprep.subr.mxu0 0.0
    %183 = vmatpush1.msra.mxu0 %v94
    %184 = vmatprep.subr.mxu0 0.0
    %185 = vmatpush1.msra.mxu0 0.0
    %186 = vmatprep.subr.mxu0 0.0
    %187 = vmatpush1.msra.mxu0 0.0
    %188 = vmatprep.subr.mxu0 0.0
    %189 = vmatpush1.msra.mxu0 0.0
    %190 = vmatprep.subr.mxu0 0.0
    %191 = vmatpush1.msra.mxu0 0.0
    %192 = vmatprep.subr.mxu0 0.0
    %193 = vmatpush1.msra.mxu0 0.0
    %194 = vmatprep.subr.mxu0 0.0
    %195 = vmatpush1.msra.mxu0 0.0
    %196 = vmatprep.subr.mxu0 0.0
    %197 = vmatpush1.msra.mxu0 0.0
    %198 = vmatprep.subr.mxu0 0.0
    %199 = vmatpush1.msra.mxu0 0.0
    %200 = vmatprep.subr.mxu0 0.0
    %201 = vmatpush1.msra.mxu0 0.0
    %202 = vmatprep.subr.mxu0 0.0
    %203 = vmatpush1.msra.mxu0 0.0
    %204 = vmatprep.subr.mxu0 0.0
    %205 = vmatpush1.msra.mxu0 0.0
    %206 = vmatprep.subr.mxu0 0.0
    %207 = vmatpush1.msra.mxu0 0.0
    %208 = vmatprep.subr.mxu0 0.0
    %209 = vmatpush1.msra.mxu0 0.0
    %210 = vmatprep.subr.mxu0 0.0
    %211 = vmatpush1.msra.mxu0 0.0
    %212 = vmatprep.subr.mxu0 0.0
    %213 = vmatpush1.msra.mxu0 0.0
    %214 = vmatprep.subr.mxu0 0.0
    %215 = vmatpush1.msra.mxu0 0.0
    %216 = vmatprep.subr.mxu0 0.0
    %217 = vmatpush1.msra.mxu0 0.0
    %218 = vmatprep.subr.mxu0 0.0
    %219 = vmatpush1.msra.mxu0 0.0
    %220 = vmatprep.subr.mxu0 0.0
    %221 = vmatpush1.msra.mxu0 0.0
    %222 = vmatprep.subr.mxu0 0.0
    %223 = vmatpush1.msra.mxu0 0.0
    %224 = vmatprep.subr.mxu0 0.0
    %225 = vmatpush1.msra.mxu0 0.0
    %226 = vmatprep.subr.mxu0 0.0
    %227 = vmatpush1.msra.mxu0 0.0
    %228 = vmatprep.subr.mxu0 0.0
    %229 = vmatpush1.msra.mxu0 0.0
    %230 = vmatprep.subr.mxu0 0.0
    %231 = vmatpush1.msra.mxu0 0.0
    %232 = vmatprep.subr.mxu0 0.0
    %233 = vmatpush1.msra.mxu0 0.0
    %234 = vmatprep.subr.mxu0 0.0
    %235 = vmatpush1.msra.mxu0 0.0
    %236 = vmatprep.subr.mxu0 0.0
    %237 = vmatpush1.msra.mxu0 0.0
    %238 = vmatprep.subr.mxu0 0.0
    %239 = vmatpush1.msra.mxu0 0.0
    %240 = vmatprep.mubr.f32.mxu0 0.0
    %241 = vmatmul.mubr.f32.gmra.mrb[0].mxu0 %v174
    %v242 = vpop.f32.mrb[0].mxu0
    %v243 = vadd.f32 %v170, %v242
    %v244 = vpop.f32.mrb[0].mxu0
    %245 = vdwg.mxu0
    %v246 = vld [vmem:[%s5] sm:$0x1]
    %v248 = vlaneseq
    %v249 = vshrl.u32 %v248, 7
    %v250 = vsub.s32 0, %v249
    %v251 = vrot.slane %v246, %v250
    %v253 = vadd.f32 %v243, %v251
    %v254 = vxor.u32 %v253, 2147483648
    %v255 = vmul.f32 %v254, 1.442695
    %v256 = vpow.pop %v255
    %v257 = vadd.f32 %v256, 1.0
    %v258 = vrcp.pop %v257
    %v259 = vmul.f32 1.0, %v258
    %v260 = vtanh.pop %v253
    %v261 = vld [vmem:[#allocation7] sm:$0xff]
    %263 = vrot.lane.b32.xlu0 %v261, 32
    %v264 = vpop.permute.xlu0 %263
    %v266 = vmul.f32 %v259, %v264
    %268 = vrot.lane.b32.xlu0 %v260, 32
    %v269 = vpop.permute.xlu0 %268
    %v271 = vmul.f32 %v259, %v269
    %273 = vrot.lane.b32.xlu0 %v271, 32
    %v274 = vpop.permute.xlu0 %273
    %v276 = vadd.f32 %v266, %v274
    %v277 = vtanh.pop %v276
    %279 = vrot.lane.b32.xlu0 %v277, 32
    %v280 = vpop.permute.xlu0 %279
    %v282 = vmul.f32 %v259, %v280
    %284 = vrot.lane.b32.xlu0 %v276, 96
    %v285 = vpop.permute.xlu0 %284
    %287 = vst.msk [vmem:[#allocation12] sm:$0xff] %vm99, %v285
    %289 = vrot.lane.b32.xlu0 %v282, 64
    %v290 = vpop.permute.xlu0 %289
    %292 = vst.msk [vmem:[#allocation11] sm:$0xff] %vm99, %v290
    // Predicated region
    $region46: #{tpu_custom_call.1} parent=1 // pred_check
      _
    $region47: #{tpu_custom_call.1} parent=1 // pred_check_branch
      %294 = sbr.rel (0) target = $region49
    $region48: #{tpu_custom_call.1} parent=1 // pred_region
      %s296 = ssub.s32 128, 128
      %297 = vsyncadd [#allocation4], %s296
      %s299 = sshll.u32 [#allocation11], 4
      %s300 = int_to_ptr.vmem [resolvable:$true] %s299
      %302 = dma.vmem_to_hbm [thread:$0]  %s300, 128, %s6, [#allocation4]
    $region49: #{tpu_custom_call.1} parent=1 // pred_fallthru
      _
    // Predicated region
    $region50: #{tpu_custom_call.1} parent=1 // pred_check
      _
    $region51: #{tpu_custom_call.1} parent=1 // pred_check_branch
      %304 = sbr.rel (0) target = $region53
    $region52: #{tpu_custom_call.1} parent=1 // pred_region
      %s306 = ssub.s32 128, 128
      %307 = vsyncadd [#allocation13], %s306
      %s309 = sshll.u32 [#allocation12], 4
      %s310 = int_to_ptr.vmem [resolvable:$true] %s309
      %312 = dma.vmem_to_hbm [thread:$0]  %s310, 128, %s7, [#allocation13]
    $region53: #{tpu_custom_call.1} parent=1 // pred_fallthru
      _
    // Predicated region
    $region54: #{tpu_custom_call.1} parent=1 // pred_check
      _
    $region55: #{tpu_custom_call.1} parent=1 // pred_check_branch
      %314 = sbr.rel (0) target = $region57
    $region56: #{tpu_custom_call.1} parent=1 // pred_region
      %315 = dma.done [#allocation4], 128
    $region57: #{tpu_custom_call.1} parent=1 // pred_fallthru
      _
    // Predicated region
    $region58: #{tpu_custom_call.1} parent=1 // pred_check
      _
    $region59: #{tpu_custom_call.1} parent=1 // pred_check_branch
      %317 = sbr.rel (0) target = $region61
    $region60: #{tpu_custom_call.1} parent=1 // pred_region
      %318 = dma.done [#allocation13], 128
    $region61: #{tpu_custom_call.1} parent=1 // pred_fallthru
      _
    %319 = vsyncpa [#allocation3], 1
    %320 = vsyncpa [#allocation6], 1
    %321 = vsyncpa [#allocation9], 1
    %322 = vsyncpa [#allocation4], 1
    %323 = vsyncpa [#allocation13], 1

</llo_original>
